<compile_context>
chip_gen: v6e
topology: v6e:2x2x1
jax: 0.10.0
libtpu: 0.0.40
codegen_flags: <defaults>
</compile_context>

<pallas_src>
import functools

import jax
import jax.numpy as jnp
from jax.experimental import pallas as pl
from jax.experimental.pallas import tpu as pltpu


def _frm_kernel(token_ref, feat_ref, out_ref, *, scale, patch_length, token_length):
    P = patch_length
    T = token_length

    # Static slices of the per-block feature tile (BB, 4P, Dt).
    head = feat_ref[:, 0 * P:1 * P, :]
    body1 = feat_ref[:, 1 * P:2 * P, :]
    body2 = feat_ref[:, 2 * P:3 * P, :]
    tail = feat_ref[:, 3 * P:4 * P, :]

    # Fused rearrangement (pure VPU axpy + copies), written directly into the
    # concatenated output layout: [token | head' | body1 | body2 | tail'].
    # `scale` is a weak-typed Python float so bf16 inputs stay bf16, matching
    # the reference's dtype promotion.
    out_ref[:, 0:T, :] = token_ref[...].astype(out_ref.dtype)
    out_ref[:, T:T + P, :] = (head * scale + body1).astype(out_ref.dtype)
    # body1|body2 passthrough as a single contiguous 2P-row copy.
    out_ref[:, T + P:T + 3 * P, :] = feat_ref[:, P:3 * P, :].astype(out_ref.dtype)
    out_ref[:, T + 3 * P:T + 4 * P, :] = (tail * scale + body2).astype(out_ref.dtype)


def _choose_tiles(B, T, P, D, itemsize, target_block_bytes=1 << 20):
    """Pick (batch_block, d_block).

    Goals: largest (output) block ~= target_block_bytes, blocks evenly divide
    the arrays (no padded edge blocks), and the grid keeps >= 2 steps whenever
    B >= 2 so v7x's two TensorCores both get work.
    """
    out_rows = T + 4 * P

    # D tile: a multiple of 128 that divides D; full D if not lane-aligned
    # (the BlockSpec rule requires full-dim blocks in that case).
    if D % 128 == 0 and D > 128:
        d_block = 128
        for mult in range(D // 128, 0, -1):
            cand = 128 * mult
            if D % cand == 0 and out_rows * cand * itemsize <= target_block_bytes:
                d_block = cand
                break
    else:
        d_block = D

    # Batch tile: pack batches until the output block reaches the target.
    per_batch = out_rows * d_block * itemsize
    b_block = max(1, min(B, target_block_bytes // max(per_batch, 1)))
    if B >= 2:
        b_block = min(b_block, (B + 1) // 2)  # keep at least 2 grid steps
    while B % b_block:
        b_block -= 1
    return b_block, d_block


def frm_forward(token, features, patch_length, frm_scale):
    """token: (B, T, D), features: (B, 4*P, D) -> (B, T + 4*P, D)."""
    B, T, D = token.shape
    Bf, S, Df = features.shape
    P = patch_length
    assert B == Bf and D == Df and S == 4 * P
    assert token.dtype == features.dtype

    out_seq = T + 4 * P
    itemsize = jnp.dtype(features.dtype).itemsize

    b_block, d_block = _choose_tiles(B, T, P, D, itemsize)
    n_b = B // b_block
    n_d = D // d_block

    # ~2x for double-buffering of every spec, plus 2x slack; clamped so it is
    # comfortably inside v7x's 64 MiB physical VMEM.
    block_bytes = b_block * d_block * itemsize * (T + S + out_seq)
    vmem_limit = int(min(48 << 20, max(32 << 20, 4 * block_bytes)))

    kernel = functools.partial(
        _frm_kernel,
        scale=frm_scale,
        patch_length=P,
        token_length=T,
    )

    return pl.pallas_call(
        kernel,
        out_shape=jax.ShapeDtypeStruct((B, out_seq, D), features.dtype),
        grid_spec=pltpu.PrefetchScalarGridSpec(
            num_scalar_prefetch=0,
            grid=(n_b, n_d),
            in_specs=[
                pl.BlockSpec((b_block, T, d_block), lambda b, d: (b, 0, d)),
                pl.BlockSpec((b_block, S, d_block), lambda b, d: (b, 0, d)),
            ],
            out_specs=pl.BlockSpec((b_block, out_seq, d_block), lambda b, d: (b, 0, d)),
        ),
        compiler_params=pltpu.CompilerParams(
            dimension_semantics=("parallel", "parallel"),
            vmem_limit_bytes=vmem_limit,
        ),
    )(token, features)


def frm_reference(token, features, patch_length, frm_scale):
    P = patch_length
    head = features[:, :P]
    body1 = features[:, P:2 * P]
    body2 = features[:, 2 * P:3 * P]
    tail = features[:, 3 * P:4 * P]
    head = head * frm_scale + body1
    tail = tail * frm_scale + body2
    return jnp.concatenate([token, head, body1, body2, tail], axis=1)


if __name__ == "__main__":
    # Case 1: CLS token (T=1, sublane-misaligned offsets path).
    B, T, P, D = 2, 1, 8, 128
    FRM_scale = 0.5

    key = jax.random.PRNGKey(0)
    k_tok, k_feat = jax.random.split(key)
    token = jax.random.normal(k_tok, (B, T, D), dtype=jnp.float32)
    features = jax.random.normal(k_feat, (B, 4 * P, D), dtype=jnp.float32)

    out = jax.block_until_ready(frm_forward(token, features, P, FRM_scale))
    ref = frm_reference(token, features, P, FRM_scale)
    assert out.shape == (B, T + 4 * P, D)
    assert jnp.allclose(out, ref, atol=1e-6, rtol=1e-6)

    # Case 2: sublane-aligned token length (fully unmasked stores) + batch
    # packing / D-tiling heuristics exercised.
    B2, T2, P2, D2 = 4, 8, 16, 256
    k_tok2, k_feat2 = jax.random.split(jax.random.PRNGKey(1))
    token2 = jax.random.normal(k_tok2, (B2, T2, D2), dtype=jnp.float32)
    features2 = jax.random.normal(k_feat2, (B2, 4 * P2, D2), dtype=jnp.float32)

    out2 = jax.block_until_ready(frm_forward(token2, features2, P2, FRM_scale))
    ref2 = frm_reference(token2, features2, P2, FRM_scale)
    assert out2.shape == (B2, T2 + 4 * P2, D2)
    assert jnp.allclose(out2, ref2, atol=1e-6, rtol=1e-6)

    print("KERNEL_OK")
</pallas_src>

<mosaic_0001>
module attributes {stable_mosaic.version = 11 : i64} {
  func.func @_frm_kernel(%arg0: i32, %arg1: i32, %arg2: memref<1x1x128xf32, #tpu.memory_space<vmem>>, %arg3: memref<1x32x128xf32, #tpu.memory_space<vmem>>, %arg4: memref<1x33x128xf32, #tpu.memory_space<vmem>>) attributes {dimension_semantics = [#tpu.dimension_semantics<parallel>, #tpu.dimension_semantics<parallel>], iteration_bounds = array<i64: 2, 1>, scalar_prefetch = 0 : i64, scratch_operands = 0 : i64, tpu.core_type = #tpu.core_type<tc>, window_params = [{transform_indices = @transform_0, window_bounds = array<i64: 1, 1, 128>}, {transform_indices = @transform_1, window_bounds = array<i64: 1, 32, 128>}, {transform_indices = @transform_2, window_bounds = array<i64: 1, 33, 128>}]} {
    %c0 = arith.constant 0 : index
    %c0_0 = arith.constant 0 : index
    %c0_1 = arith.constant 0 : index
    %0 = vector.load %arg3[%c0, %c0_0, %c0_1] : memref<1x32x128xf32, #tpu.memory_space<vmem>>, vector<1x8x128xf32>
    %c0_2 = arith.constant 0 : index
    %c8 = arith.constant 8 : index
    %c0_3 = arith.constant 0 : index
    %1 = vector.load %arg3[%c0_2, %c8, %c0_3] : memref<1x32x128xf32, #tpu.memory_space<vmem>>, vector<1x8x128xf32>
    %c0_4 = arith.constant 0 : index
    %c16 = arith.constant 16 : index
    %c0_5 = arith.constant 0 : index
    %2 = vector.load %arg3[%c0_4, %c16, %c0_5] : memref<1x32x128xf32, #tpu.memory_space<vmem>>, vector<1x8x128xf32>
    %c0_6 = arith.constant 0 : index
    %c24 = arith.constant 24 : index
    %c0_7 = arith.constant 0 : index
    %3 = vector.load %arg3[%c0_6, %c24, %c0_7] : memref<1x32x128xf32, #tpu.memory_space<vmem>>, vector<1x8x128xf32>
    %c0_8 = arith.constant 0 : index
    %c0_9 = arith.constant 0 : index
    %c0_10 = arith.constant 0 : index
    %4 = vector.load %arg2[%c0_8, %c0_9, %c0_10] : memref<1x1x128xf32, #tpu.memory_space<vmem>>, vector<1x1x128xf32>
    %c0_11 = arith.constant 0 : index
    %c0_12 = arith.constant 0 : index
    %c0_13 = arith.constant 0 : index
    %5 = vector.load %arg4[%c0_11, %c0_12, %c0_13] : memref<1x33x128xf32, #tpu.memory_space<vmem>>, vector<1x1x128xf32>
    tpu.vector_store %arg4[%c0_11, %c0_12, %c0_13], %4 {strides = array<i32>} : memref<1x33x128xf32, #tpu.memory_space<vmem>>, vector<1x1x128xf32>,
    %cst = arith.constant 5.000000e-01 : f32
    %6 = vector.broadcast %cst : f32 to vector<1x8x128xf32>
    %7 = arith.mulf %0, %6 : vector<1x8x128xf32>
    %8 = arith.addf %7, %1 : vector<1x8x128xf32>
    %c0_14 = arith.constant 0 : index
    %c1 = arith.constant 1 : index
    %c0_15 = arith.constant 0 : index
    %9 = vector.load %arg4[%c0_14, %c1, %c0_15] : memref<1x33x128xf32, #tpu.memory_space<vmem>>, vector<1x8x128xf32>
    tpu.vector_store %arg4[%c0_14, %c1, %c0_15], %8 {strides = array<i32>} : memref<1x33x128xf32, #tpu.memory_space<vmem>>, vector<1x8x128xf32>,
    %c0_16 = arith.constant 0 : index
    %c8_17 = arith.constant 8 : index
    %c0_18 = arith.constant 0 : index
    %10 = vector.load %arg3[%c0_16, %c8_17, %c0_18] : memref<1x32x128xf32, #tpu.memory_space<vmem>>, vector<1x16x128xf32>
    %c0_19 = arith.constant 0 : index
    %c9 = arith.constant 9 : index
    %c0_20 = arith.constant 0 : index
    %11 = vector.load %arg4[%c0_19, %c9, %c0_20] : memref<1x33x128xf32, #tpu.memory_space<vmem>>, vector<1x16x128xf32>
    tpu.vector_store %arg4[%c0_19, %c9, %c0_20], %10 {strides = array<i32>} : memref<1x33x128xf32, #tpu.memory_space<vmem>>, vector<1x16x128xf32>,
    %cst_21 = arith.constant 5.000000e-01 : f32
    %12 = vector.broadcast %cst_21 : f32 to vector<1x8x128xf32>
    %13 = arith.mulf %3, %12 : vector<1x8x128xf32>
    %14 = arith.addf %13, %2 : vector<1x8x128xf32>
    %c0_22 = arith.constant 0 : index
    %c25 = arith.constant 25 : index
    %c0_23 = arith.constant 0 : index
    %15 = vector.load %arg4[%c0_22, %c25, %c0_23] : memref<1x33x128xf32, #tpu.memory_space<vmem>>, vector<1x8x128xf32>
    tpu.vector_store %arg4[%c0_22, %c25, %c0_23], %14 {strides = array<i32>} : memref<1x33x128xf32, #tpu.memory_space<vmem>>, vector<1x8x128xf32>,
    return
  }
  func.func @transform_0(%arg0: i32, %arg1: i32) -> (i32, i32, i32) {
    %c0_i32 = arith.constant 0 : i32
    %c0_i32_0 = arith.constant 0 : i32
    return %arg0, %c0_i32, %arg1 : i32, i32, i32
  }
  func.func @transform_1(%arg0: i32, %arg1: i32) -> (i32, i32, i32) {
    %c0_i32 = arith.constant 0 : i32
    %c0_i32_0 = arith.constant 0 : i32
    return %arg0, %c0_i32, %arg1 : i32, i32, i32
  }
  func.func @transform_2(%arg0: i32, %arg1: i32) -> (i32, i32, i32) {
    %c0_i32 = arith.constant 0 : i32
    %c0_i32_0 = arith.constant 0 : i32
    return %arg0, %c0_i32, %arg1 : i32, i32, i32
  }
}

</mosaic_0001>

<llo_original>
// kernel: tpu_custom_call.1
$region0: #{tpu_custom_call.1}
  #allocation0 [shape = 'u32[]', space=smem, size = 0x4, offset = 0x4, fixed_abs, tag = 'smem constant byte address 0x4 - core index']
  #allocation1 [shape = 'u32[144,128]{1,0:T(1,128)}', space=vmem, size = 0x12000, scoped, tag = 'internal scratch']
  %s0 = inlined_call_operand.hbm [shape: f32[2,1,128], index: 0, kind: input, shape index: {}]
  %s1 = inlined_call_operand.hbm [shape: f32[2,32,128], index: 1, kind: input, shape index: {}]
  %s2 = inlined_call_operand.vmem [shape: f32[2,33,128], index: 2, kind: output, shape index: {}]
  %s3 = sld [smem:[#allocation0]]
  $region49: #{tpu_custom_call.1} parent=0
    _
  %s5 = ssub.s32 1, %s3
  %s6 = scalar_select 0, %s5, %s3
  $region1: #{tpu_custom_call.1} parent=0
    #allocation2 [shape = 'u8[1024]{0}', space=vmem, size = 0x400, scoped, tag = 'input window, operand 0']
    #allocation3 [shape = 's32[2]{0}', space=sflag, size = 0x8, scoped, tag = 'scoped memory for tpu_custom_call.1']
    #allocation4 [shape = 'u8[32768]{0}', space=vmem, size = 0x8000, scoped, tag = 'input window, operand 1']
    #allocation5 [shape = 's32[2]{0}', space=sflag, size = 0x8, scoped, tag = 'scoped memory for tpu_custom_call.1']
    %7 = vsyncpa [#allocation3], 0
    %s8 = scalar_lea.sflag [#allocation3], 1
    %9 = vsyncpa %s8, 0
    %10 = vsyncpa [#allocation5], 0
    %s11 = scalar_lea.sflag [#allocation5], 1
    %12 = vsyncpa %s11, 0
    loop: start=0, step=1, limit=4
    $region2: #{tpu_custom_call.1} parent=1 // loop_pre_header
      _
    $region3: #{tpu_custom_call.1} parent=1 // loop_header
      %s14 = sphi 0, %s18
      %p15 = scmp.ge.s32.totalorder %s14, 4
      %s21 = sphi 0, %s33
      %s22 = sphi 0, %s29
      %s23 = sphi 0, %s21
      %s24 = sphi 0, %s22
      %s25 = sphi 0, %s23
      %s26 = sphi 0, %s24
      %s38 = sphi 0, %s40
      %s41 = sphi 0, %s38
      %s42 = sphi 0, %s41
      %s58 = sphi 0, %s42
      %s66 = sphi 0, %s68
      %s69 = sphi 0, %s66
      %s70 = sphi 0, %s69
      %s86 = sphi 0, %s70
      %s94 = sphi 0, %s96
      %s97 = sphi 0, %s94
      %s98 = sphi 0, %s97
      %s114 = sphi 0, %s98
    $region4: #{tpu_custom_call.1} parent=1 // loop_header_branch
      %17 = sbr.rel (%p15) target = $region8
    $region5: #{tpu_custom_call.1} parent=1 // loop_body
      %s19 = ssub.s32 %s14, 1
      %s20 = ssub.s32 %s14, 2
      %s27 = sadd.s32 1, %s22
      %p28 = scmp.ge.s32.totalorder %s27, 1
      %s29 = scalar_select %p28, 0, %s27
      %s30 = sadd.s32 1, %s21
      %s31 = scalar_select %p28, %s30, %s21
      %p32 = scmp.ge.s32.totalorder %s31, 2
      %s33 = scalar_select %p32, 0, %s31
      %s34 = ssub.s32 %s21, %s33
      %s35 = ssub.s32 %s22, %s29
      %s36 = sor.u32 %s34, %s35
      %p37 = scmp.eq.s32.totalorder %s36, 0
      %s39 = sadd.s32 %s38, 1
      %s40 = scalar_select %p37, %s38, %s39
      %p43 = pneg %p37
      %p44 = scmp.eq.s32.totalorder %s14, 1
      %p45 = por %p43, %p44
      %p46 = scmp.ne.s32.totalorder %s38, %s41
      %p47 = scmp.eq.s32.totalorder %s14, 0
      %p48 = por %p46, %p47
      %p49 = scmp.ne.s32.totalorder %s38, %s41
      %p50 = scmp.eq.s32.totalorder %s19, 1
      %p51 = por %p49, %p50
      %p52 = scmp.ne.s32.totalorder %s41, %s42
      %p53 = scmp.eq.s32.totalorder %s19, 0
      %p54 = por %p52, %p53
      %p55 = scmp.ne.s32.totalorder %s41, %s42
      %p56 = scmp.eq.s32.totalorder %s20, 1
      %p57 = por %p55, %p56
      %p59 = scmp.ne.s32.totalorder %s42, %s58
      %p60 = scmp.eq.s32.totalorder %s20, 0
      %p61 = por %p59, %p60
      %s62 = ssub.s32 %s21, %s33
      %s63 = ssub.s32 %s22, %s29
      %s64 = sor.u32 %s62, %s63
      %p65 = scmp.eq.s32.totalorder %s64, 0
      %s67 = sadd.s32 %s66, 1
      %s68 = scalar_select %p65, %s66, %s67
      %p71 = pneg %p65
      %p72 = scmp.eq.s32.totalorder %s14, 1
      %p73 = por %p71, %p72
      %p74 = scmp.ne.s32.totalorder %s66, %s69
      %p75 = scmp.eq.s32.totalorder %s14, 0
      %p76 = por %p74, %p75
      %p77 = scmp.ne.s32.totalorder %s66, %s69
      %p78 = scmp.eq.s32.totalorder %s19, 1
      %p79 = por %p77, %p78
      %p80 = scmp.ne.s32.totalorder %s69, %s70
      %p81 = scmp.eq.s32.totalorder %s19, 0
      %p82 = por %p80, %p81
      %p83 = scmp.ne.s32.totalorder %s69, %s70
      %p84 = scmp.eq.s32.totalorder %s20, 1
      %p85 = por %p83, %p84
      %p87 = scmp.ne.s32.totalorder %s70, %s86
      %p88 = scmp.eq.s32.totalorder %s20, 0
      %p89 = por %p87, %p88
      %s90 = ssub.s32 %s21, %s33
      %s91 = ssub.s32 %s22, %s29
      %s92 = sor.u32 %s90, %s91
      %p93 = scmp.eq.s32.totalorder %s92, 0
      %s95 = sadd.s32 %s94, 1
      %s96 = scalar_select %p93, %s94, %s95
      %p99 = pneg %p93
      %p100 = scmp.eq.s32.totalorder %s14, 1
      %p101 = por %p99, %p100
      %p102 = scmp.ne.s32.totalorder %s94, %s97
      %p103 = scmp.eq.s32.totalorder %s14, 0
      %p104 = por %p102, %p103
      %p105 = scmp.ne.s32.totalorder %s94, %s97
      %p106 = scmp.eq.s32.totalorder %s19, 1
      %p107 = por %p105, %p106
      %p108 = scmp.ne.s32.totalorder %s97, %s98
      %p109 = scmp.eq.s32.totalorder %s19, 0
      %p110 = por %p108, %p109
      %p111 = scmp.ne.s32.totalorder %s97, %s98
      %p112 = scmp.eq.s32.totalorder %s20, 1
      %p113 = por %p111, %p112
      %p115 = scmp.ne.s32.totalorder %s98, %s114
      %p116 = scmp.eq.s32.totalorder %s20, 0
      %p117 = por %p115, %p116
      %p118 = scmp.le.s32.totalorder 1, %s14
      %p119 = scmp.lt.s32.totalorder %s14, 3
      %p120 = pnand %p118, %p119
      %p121 = pneg %p120
      // Predicated region
      $region9: #{tpu_custom_call.1} parent=5 // pred_check
        _
      $region10: #{tpu_custom_call.1} parent=5 // pred_check_branch
        %123 = sbr.rel (%p120) target = $region12
      $region11: #{tpu_custom_call.1} parent=5 // pred_region
        %s124 = ssub.s32 %s14, 1
      $region12: #{tpu_custom_call.1} parent=5 // pred_fallthru
        _
      %p125 = scmp.lt.s32.totalorder %s14, 2
      // Predicated region
      $region13: #{tpu_custom_call.1} parent=5 // pred_check
        %p126 = pneg %p125
      $region14: #{tpu_custom_call.1} parent=5 // pred_check_branch
        %128 = sbr.rel (%p126) target = $region16
      $region15: #{tpu_custom_call.1} parent=5 // pred_region
        // Predicated region
        $region17: #{tpu_custom_call.1} parent=15 // pred_check
          %p129 = pneg %p48
        $region18: #{tpu_custom_call.1} parent=15 // pred_check_branch
          %131 = sbr.rel (%p129) target = $region20
        $region19: #{tpu_custom_call.1} parent=15 // pred_region
          %s132 = sand.u32 %s38, 1
          %s133 = scalar_lea.sflag [#allocation3], %s132
          %s134 = sand.u32 %s38, 1
          %s135 = scalar_lea.vmem [#allocation2], %s134
          %s137 = ssub.s32 16, 16
          %138 = vsyncadd %s133, %s137
          %s139 = sadd.s32 %s22, %s21
          %s140 = smul.addr %s139, 16
          %s141 = scalar_lea.hbm %s0, %s140
          %s143 = sshll.u32 %s135, 4
          %s144 = int_to_ptr.vmem [resolvable:$true] %s143
          %146 = dma.hbm_to_vmem [thread:$0]  %s141, 16, %s144, %s133
        $region20: #{tpu_custom_call.1} parent=15 // pred_fallthru
          _
        // Predicated region
        $region21: #{tpu_custom_call.1} parent=15 // pred_check
          %p147 = pneg %p76
        $region22: #{tpu_custom_call.1} parent=15 // pred_check_branch
          %149 = sbr.rel (%p147) target = $region24
        $region23: #{tpu_custom_call.1} parent=15 // pred_region
          %s150 = sand.u32 %s66, 1
          %s151 = scalar_lea.sflag [#allocation5], %s150
          %s152 = sand.u32 %s66, 1
          %s153 = smul.addr %s152, 32
          %s154 = scalar_lea.vmem [#allocation4], %s153
          %s156 = ssub.s32 512, 512
          %157 = vsyncadd %s151, %s156
          %s158 = smul.addr %s21, 4
          %s159 = sadd.s32 %s22, %s158
          %s160 = smul.addr %s159, 128
          %s161 = scalar_lea.hbm %s1, %s160
          %s162 = sshll.u32 %s154, 4
          %s163 = int_to_ptr.vmem [resolvable:$true] %s162
          %168 = dma.hbm_to_vmem [thread:$0]  %s161, 512, %s163, %s151, 128, 128, 8
        $region24: #{tpu_custom_call.1} parent=15 // pred_fallthru
          _
      $region16: #{tpu_custom_call.1} parent=5 // pred_fallthru
        _
      %p169 = scmp.le.s32.totalorder 1, %s14
      %p170 = scmp.lt.s32.totalorder %s14, 3
      %p171 = pnand %p169, %p170
      %p172 = pneg %p171
      // Predicated region
      $region25: #{tpu_custom_call.1} parent=5 // pred_check
        _
      $region26: #{tpu_custom_call.1} parent=5 // pred_check_branch
        %174 = sbr.rel (%p171) target = $region28
      $region27: #{tpu_custom_call.1} parent=5 // pred_region
        %s175 = ssub.s32 %s14, 1
        %s176 = sand.u32 %s41, 1
        %s177 = scalar_lea.sflag [#allocation3], %s176
        %s178 = sand.u32 %s41, 1
        %s179 = scalar_lea.vmem [#allocation2], %s178
        // Predicated region
        $region29: #{tpu_custom_call.1} parent=27 // pred_check
          %p180 = pneg %p54
        $region30: #{tpu_custom_call.1} parent=27 // pred_check_branch
          %182 = sbr.rel (%p180) target = $region32
        $region31: #{tpu_custom_call.1} parent=27 // pred_region
          %183 = dma.done %s177, 16
        $region32: #{tpu_custom_call.1} parent=27 // pred_fallthru
          _
        %s184 = sand.u32 %s69, 1
        %s185 = scalar_lea.sflag [#allocation5], %s184
        %s186 = sand.u32 %s69, 1
        %s187 = smul.addr %s186, 32
        %s188 = scalar_lea.vmem [#allocation4], %s187
        // Predicated region
        $region33: #{tpu_custom_call.1} parent=27 // pred_check
          %p189 = pneg %p82
        $region34: #{tpu_custom_call.1} parent=27 // pred_check_branch
          %191 = sbr.rel (%p189) target = $region36
        $region35: #{tpu_custom_call.1} parent=27 // pred_region
          %192 = dma.done %s185, 512
        $region36: #{tpu_custom_call.1} parent=27 // pred_fallthru
          _
        %s193 = sand.u32 %s41, 1
        %s194 = scalar_lea.sflag [#allocation3], %s193
        %s195 = sand.u32 %s41, 1
        %s196 = scalar_lea.vmem [#allocation2], %s195
        %p197 = pneg %p54
        %p198 = pneg %p51
        %s199 = sand.u32 %s69, 1
        %s200 = scalar_lea.sflag [#allocation5], %s199
        %s201 = sand.u32 %s69, 1
        %s202 = smul.addr %s201, 32
        %s203 = scalar_lea.vmem [#allocation4], %s202
        %p204 = pneg %p82
        %p205 = pneg %p79
        %p206 = pneg %p110
        %p207 = pneg %p107
        %p208 = scmp.lt.s32.totalorder %s23, 1
        %s209 = scalar_select %p208, %s23, 1
        %p210 = scmp.lt.s32.totalorder %s24, 0
        %s211 = scalar_select %p210, %s24, 0
        %s212 = smul.addr %s209, 5
        %s213 = sadd.s32 %s211, %s212
        %s214 = smul.addr %s213, 8
        %s215 = scalar_lea.vmem %s2, %s214
        %p216 = scmp.lt.s32.totalorder %s23, 1
        %s217 = scalar_select %p216, %s23, 1
        %p218 = scmp.lt.s32.totalorder %s24, 0
        %s219 = scalar_select %p218, %s24, 0
        %s220 = smul.addr %s217, 5
        %s221 = sadd.s32 %s219, %s220
        %s222 = smul.addr %s221, 8
        %s223 = scalar_lea.vmem %s2, %s222
        %v224 = vld [vmem:[%s188] sm:$0xff]
        %v225 = vld [vmem:[%s188 + $0x8] sm:$0xff]
        %v226 = vld [vmem:[%s188 + $0x10] sm:$0xff]
        %v227 = vld [vmem:[%s188 + $0x18] sm:$0xff]
        %v228 = vld [vmem:[%s179] sm:$0x1]
        %229 = vst [vmem:[%s223] sm:$0x1] %v228
        %v230 = vmul.f32 %v224, 0.5
        %v231 = vadd.f32 %v230, %v225
        %232 = vst [vmem:[%s223 + $0x1] sm:$0xff] %v231
        %v233 = vld [vmem:[%s188 + $0x8] sm:$0xff]
        %v234 = vld [vmem:[%s188 + $0x10] sm:$0xff]
        %235 = vst [vmem:[%s223 + $0x9] sm:$0xff] %v233
        %236 = vst [vmem:[%s223 + $0x11] sm:$0xff] %v234
        %v237 = vmul.f32 %v227, 0.5
        %v238 = vadd.f32 %v237, %v226
        %239 = vst [vmem:[%s223 + $0x19] sm:$0xff] %v238
        %p240 = scmp.lt.s32.totalorder %s23, 1
        %s241 = scalar_select %p240, %s23, 1
        %p242 = scmp.lt.s32.totalorder %s24, 0
        %s243 = scalar_select %p242, %s24, 0
        %s244 = smul.addr %s241, 5
        %s245 = sadd.s32 %s243, %s244
        %s246 = smul.addr %s245, 8
        %s247 = scalar_lea.vmem %s2, %s246
        // Predicated region
        $region37: #{tpu_custom_call.1} parent=27 // pred_check
          %p248 = pneg %p107
        $region38: #{tpu_custom_call.1} parent=27 // pred_check_branch
          %250 = sbr.rel (%p248) target = $region40
        $region39: #{tpu_custom_call.1} parent=27 // pred_region
          _
        $region40: #{tpu_custom_call.1} parent=27 // pred_fallthru
          _
      $region28: #{tpu_custom_call.1} parent=5 // pred_fallthru
        _
      %p251 = scmp.le.s32.totalorder 2, %s14
      // Predicated region
      $region41: #{tpu_custom_call.1} parent=5 // pred_check
        %p252 = pneg %p251
      $region42: #{tpu_custom_call.1} parent=5 // pred_check_branch
        %254 = sbr.rel (%p252) target = $region44
      $region43: #{tpu_custom_call.1} parent=5 // pred_region
        %s255 = ssub.s32 %s14, 2
        // Predicated region
        $region45: #{tpu_custom_call.1} parent=43 // pred_check
          %p256 = pneg %p113
        $region46: #{tpu_custom_call.1} parent=43 // pred_check_branch
          %258 = sbr.rel (%p256) target = $region48
        $region47: #{tpu_custom_call.1} parent=43 // pred_region
          %p259 = scmp.lt.s32.totalorder %s25, 1
          %s260 = scalar_select %p259, %s25, 1
          %p261 = scmp.lt.s32.totalorder %s26, 0
          %s262 = scalar_select %p261, %s26, 0
          %s263 = smul.addr %s260, 5
          %s264 = sadd.s32 %s262, %s263
          %s265 = smul.addr %s264, 8
          %s266 = scalar_lea.vmem %s2, %s265
        $region48: #{tpu_custom_call.1} parent=43 // pred_fallthru
          _
      $region44: #{tpu_custom_call.1} parent=5 // pred_fallthru
        _
    $region6: #{tpu_custom_call.1} parent=1 // loop_footer
      %s18 = sadd.s32 1, %s14
    $region7: #{tpu_custom_call.1} parent=1 // loop_footer_branch
      %13 = sbr.rel target = $region3
    $region8: #{tpu_custom_call.1} parent=1 // loop_exit
      _
    %267 = vsyncpa [#allocation3], 1
    %s268 = scalar_lea.sflag [#allocation3], 1
    %269 = vsyncpa %s268, 1
    %270 = vsyncpa [#allocation5], 1
    %s271 = scalar_lea.sflag [#allocation5], 1
    %272 = vsyncpa %s271, 1

</llo_original>
